<compile_context>
chip_gen: v7x
topology: tpu7x:2x2x1
jax: 0.10.0
libtpu: 0.0.40
codegen_flags: <defaults>
</compile_context>

<pallas_src>
import functools

import jax
import jax.numpy as jnp
from jax.experimental import pallas as pl
from jax.experimental.pallas import tpu as pltpu


def _round_up(x, m):
    return ((x + m - 1) // m) * m


def _cdiv(a, b):
    return (a + b - 1) // b


def _fused_encoder_kernel(x_ref, w0_ref, ws_ref, bs_ref, o_ref, *,
                          num_layers, activation):
    """Fused [Linear, activation] * num_layers on one batch tile.

    x_ref : (tm, D0)       f32 input tile (unpadded feature dim)
    w0_ref: (D0, Hp)       bf16 first-layer weight, transposed to (in, out)
    ws_ref: (L-1, Hp, Hp)  bf16 stacked hidden/output weights (transposed)
    bs_ref: (L, 1, Hp)     f32 stacked bias rows (zero lane-padded)
    o_ref : (tm, Hp)       bf16 output tile (lane-dense store)
    """
    def act(y):
        if activation == "relu":
            return jnp.maximum(y, 0.0)
        if activation == "tanh":
            return jnp.tanh(y)          # EUP slot
        return y                        # identity

    # Layer 0: cast input to the MXU compute dtype in-kernel (no wrapper pad).
    h = x_ref[...].astype(w0_ref.dtype)
    y = jnp.dot(h, w0_ref[...], preferred_element_type=jnp.float32)
    y = act(y + bs_ref[0])              # fused bias + activation (one VPU pass)

    # Remaining layers: intermediates stay in vregs/VMEM, bf16 into the MXU.
    for l in range(1, num_layers):
        h = y.astype(ws_ref.dtype)
        y = jnp.dot(h, ws_ref[l - 1], preferred_element_type=jnp.float32)
        y = act(y + bs_ref[l])

    o_ref[...] = y.astype(o_ref.dtype)  # bf16, 128-lane-dense store


def init_encoder_params(key, layers_dim):
    """Deterministic init matching nn.Linear shapes: W (out, in), b (out,)."""
    params = []
    for i in range(1, len(layers_dim)):
        fan_in, fan_out = layers_dim[i - 1], layers_dim[i]
        key, kw, kb = jax.random.split(key, 3)
        bound = 1.0 / jnp.sqrt(fan_in)
        w = jax.random.uniform(kw, (fan_out, fan_in), jnp.float32, -bound, bound)
        b = jax.random.uniform(kb, (fan_out,), jnp.float32, -bound, bound)
        params.append((w, b))
    return params


def prepare_encoder_params(params, compute_dtype=jnp.bfloat16):
    """One-time prep: transpose to (in, out), zero-pad all layer widths to a
    common 128-lane multiple Hp, cast weights to bf16, stack hidden weights
    and biases into single operands."""
    num_layers = len(params)
    d_in0 = params[0][0].shape[1]
    d_out = params[-1][0].shape[0]
    hp = max(_round_up(w.shape[0], 128) for (w, _) in params)

    # First-layer weight keeps its true K (= d_in0); only out-lanes padded.
    w0 = jnp.zeros((d_in0, hp), compute_dtype)
    w0 = w0.at[:, :params[0][0].shape[0]].set(params[0][0].T.astype(compute_dtype))

    # Stacked hidden/output weights (zero-padded rows kill padded-lane inputs).
    n_stack = max(num_layers - 1, 1)
    wstack = jnp.zeros((n_stack, hp, hp), compute_dtype)
    for l in range(1, num_layers):
        w = params[l][0]                      # (out, in)
        out_d, in_d = w.shape
        wstack = wstack.at[l - 1, :in_d, :out_d].set(w.T.astype(compute_dtype))

    # Stacked biases, f32, zero lane-padded.
    bstack = jnp.zeros((num_layers, 1, hp), jnp.float32)
    for l in range(num_layers):
        b = params[l][1]
        bstack = bstack.at[l, 0, :b.shape[0]].set(b.astype(jnp.float32))

    return dict(w0=w0, wstack=wstack, bstack=bstack,
                d_in=d_in0, d_out=d_out, hp=hp, num_layers=num_layers)


def encoder_forward(x, prepped, activation="relu"):
    """Single fused pallas_call computing the whole encoder stack."""
    M, D0 = x.shape
    assert D0 == prepped["d_in"]
    hp = prepped["hp"]
    L = prepped["num_layers"]
    w0, wstack, bstack = prepped["w0"], prepped["wstack"], prepped["bstack"]
    n_stack = wstack.shape[0]

    # Batch tiling: big tiles (cap 1024) to amortize per-step overhead, but
    # split into >= 2 parallel tiles when possible so v7x's 2 TCs both work.
    cap = 1024
    if M <= 16:
        tm = M                                   # full-dim block, grid=(1,)
    else:
        tm = min(cap, _round_up(_cdiv(M, 2), 16))
    grid_m = _cdiv(M, tm)
    m_exec = grid_m * tm

    flops = 2 * m_exec * (D0 * hp + (L - 1) * hp * hp)
    transcendentals = m_exec * L * hp if activation == "tanh" else 0
    bytes_accessed = int(x.size * x.dtype.itemsize
                         + w0.size * w0.dtype.itemsize
                         + wstack.size * wstack.dtype.itemsize
                         + bstack.size * bstack.dtype.itemsize
                         + M * hp * 2)           # bf16 output stream

    kernel = functools.partial(
        _fused_encoder_kernel, num_layers=L, activation=activation)

    out_padded = pl.pallas_call(
        kernel,
        out_shape=jax.ShapeDtypeStruct((M, hp), jnp.bfloat16),
        grid_spec=pltpu.PrefetchScalarGridSpec(
            num_scalar_prefetch=0,
            grid=(grid_m,),
            in_specs=[
                pl.BlockSpec((tm, D0), lambda i: (i, 0)),            # x tile
                pl.BlockSpec((D0, hp), lambda i: (0, 0)),            # W0
                pl.BlockSpec((n_stack, hp, hp), lambda i: (0, 0, 0)),  # W stack
                pl.BlockSpec((L, 1, hp), lambda i: (0, 0, 0)),       # b stack
            ],
            out_specs=pl.BlockSpec((tm, hp), lambda i: (i, 0)),
        ),
        compiler_params=pltpu.CompilerParams(
            dimension_semantics=("parallel",),
        ),
        cost_estimate=pl.CostEstimate(
            flops=flops,
            transcendentals=transcendentals,
            bytes_accessed=bytes_accessed,
        ),
    )(x, w0, wstack, bstack)

    # Slice the logical columns and restore f32 (drop-in PyTorch semantics).
    return out_padded[:, :prepped["d_out"]].astype(jnp.float32)


def encoder_ref_bf16(x, params, activation="relu", compute_dtype=jnp.bfloat16):
    """Pure-JAX reference using the same bf16-operand / f32-accum math."""
    h = x
    for (w, b) in params:
        h = jnp.dot(h.astype(compute_dtype), w.T.astype(compute_dtype),
                    preferred_element_type=jnp.float32)
        h = h + b.astype(jnp.float32)
        if activation == "relu":
            h = jnp.maximum(h, 0.0)
        elif activation == "tanh":
            h = jnp.tanh(h)
    return h


def encoder_ref_f32(x, params, activation="relu"):
    """Full-precision reference (matches the PyTorch module exactly)."""
    h = x
    for (w, b) in params:
        h = h @ w.T + b
        if activation == "relu":
            h = jnp.maximum(h, 0.0)
        elif activation == "tanh":
            h = jnp.tanh(h)
    return h


if __name__ == "__main__":
    # Small shapes consistent with an MLP VAE encoder.
    layers_dim = [32, 64, 64, 16]   # input -> hidden -> hidden -> latent-ish
    activation = "relu"             # corresponds to activation_func = nn.ReLU()

    key = jax.random.PRNGKey(0)
    key, kx = jax.random.split(key)

    params = init_encoder_params(key, layers_dim)
    prepped = prepare_encoder_params(params)   # one-time transpose/pad/cast/stack

    # Exercise both the single-tile path (batch=8) and the multi-tile
    # "parallel" grid path (batch=64 -> grid=(2,)).
    for batch in (8, 64):
        kx, kb = jax.random.split(kx)
        x = jax.random.normal(kb, (batch, layers_dim[0]), jnp.float32)

        out = jax.block_until_ready(
            encoder_forward(x, prepped, activation=activation))
        assert out.shape == (batch, layers_dim[-1])

        ref_b = encoder_ref_bf16(x, params, activation=activation)
        assert jnp.allclose(out, ref_b, atol=3e-2, rtol=3e-2), \
            "mismatch vs bf16-math reference"

        ref_f = encoder_ref_f32(x, params, activation=activation)
        assert jnp.allclose(out, ref_f, atol=8e-2, rtol=8e-2), \
            "mismatch vs f32 reference"

    print("KERNEL_OK")
</pallas_src>

<mosaic_0001>
module attributes {stable_mosaic.version = 11 : i64} {
  func.func @_fused_encoder_kernel(%arg0: i32, %arg1: memref<8x32xf32, #tpu.memory_space<vmem>>, %arg2: memref<32x128xbf16, #tpu.memory_space<vmem>>, %arg3: memref<2x128x128xbf16, #tpu.memory_space<vmem>>, %arg4: memref<3x1x128xf32, #tpu.memory_space<vmem>>, %arg5: memref<8x128xbf16, #tpu.memory_space<vmem>>) attributes {dimension_semantics = [#tpu.dimension_semantics<parallel>], iteration_bounds = array<i64: 1>, scalar_prefetch = 0 : i64, scratch_operands = 0 : i64, tpu.core_type = #tpu.core_type<tc>, window_params = [{transform_indices = @transform_0, window_bounds = array<i64: 8, 32>}, {pipeline_mode = #tpu.pipeline_mode<synchronous>, transform_indices = @transform_1, window_bounds = array<i64: 32, 128>}, {pipeline_mode = #tpu.pipeline_mode<synchronous>, transform_indices = @transform_2, window_bounds = array<i64: 2, 128, 128>}, {pipeline_mode = #tpu.pipeline_mode<synchronous>, transform_indices = @transform_3, window_bounds = array<i64: 3, 1, 128>}, {transform_indices = @transform_4, window_bounds = array<i64: 8, 128>}]} {
    %c0 = arith.constant 0 : index
    %c0_0 = arith.constant 0 : index
    %0 = vector.load %arg1[%c0, %c0_0] : memref<8x32xf32, #tpu.memory_space<vmem>>, vector<8x32xf32>
    %1 = arith.truncf %0 : vector<8x32xf32> to vector<8x32xbf16>
    %c0_1 = arith.constant 0 : index
    %c0_2 = arith.constant 0 : index
    %2 = vector.load %arg2[%c0_1, %c0_2] : memref<32x128xbf16, #tpu.memory_space<vmem>>, vector<32x128xbf16>
    %cst = arith.constant dense<0.000000e+00> : vector<8x128xf32>
    %3 = tpu.matmul %1, %2, %cst {dimension_numbers = #tpu.dot_dimension_numbers<[1], [0], [0], [1], [0, 0, 1, 1], [], []>} : vector<8x32xbf16>, vector<32x128xbf16>, vector<8x128xf32> -> vector<8x128xf32>
    %c0_3 = arith.constant 0 : index
    %c0_4 = arith.constant 0 : index
    %c0_5 = arith.constant 0 : index
    %4 = vector.load %arg4[%c0_3, %c0_4, %c0_5] : memref<3x1x128xf32, #tpu.memory_space<vmem>>, vector<1x1x128xf32>
    %5 = vector.shape_cast %4 : vector<1x1x128xf32> to vector<1x128xf32>
    %6 = vector.broadcast %5 : vector<1x128xf32> to vector<8x128xf32>
    %7 = arith.addf %3, %6 : vector<8x128xf32>
    %cst_6 = arith.constant 0.000000e+00 : f32
    %8 = vector.broadcast %cst_6 : f32 to vector<8x128xf32>
    %9 = arith.maximumf %7, %8 : vector<8x128xf32>
    %10 = arith.truncf %9 : vector<8x128xf32> to vector<8x128xbf16>
    %c0_7 = arith.constant 0 : index
    %c0_8 = arith.constant 0 : index
    %c0_9 = arith.constant 0 : index
    %11 = vector.load %arg3[%c0_7, %c0_8, %c0_9] : memref<2x128x128xbf16, #tpu.memory_space<vmem>>, vector<1x128x128xbf16>
    %12 = vector.shape_cast %11 : vector<1x128x128xbf16> to vector<128x128xbf16>
    %cst_10 = arith.constant dense<0.000000e+00> : vector<8x128xf32>
    %13 = tpu.matmul %10, %12, %cst_10 {dimension_numbers = #tpu.dot_dimension_numbers<[1], [0], [0], [1], [0, 0, 1, 1], [], []>} : vector<8x128xbf16>, vector<128x128xbf16>, vector<8x128xf32> -> vector<8x128xf32>
    %c1 = arith.constant 1 : index
    %c0_11 = arith.constant 0 : index
    %c0_12 = arith.constant 0 : index
    %14 = vector.load %arg4[%c1, %c0_11, %c0_12] : memref<3x1x128xf32, #tpu.memory_space<vmem>>, vector<1x1x128xf32>
    %15 = vector.shape_cast %14 : vector<1x1x128xf32> to vector<1x128xf32>
    %16 = vector.broadcast %15 : vector<1x128xf32> to vector<8x128xf32>
    %17 = arith.addf %13, %16 : vector<8x128xf32>
    %cst_13 = arith.constant 0.000000e+00 : f32
    %18 = vector.broadcast %cst_13 : f32 to vector<8x128xf32>
    %19 = arith.maximumf %17, %18 : vector<8x128xf32>
    %20 = arith.truncf %19 : vector<8x128xf32> to vector<8x128xbf16>
    %c1_14 = arith.constant 1 : index
    %c0_15 = arith.constant 0 : index
    %c0_16 = arith.constant 0 : index
    %21 = vector.load %arg3[%c1_14, %c0_15, %c0_16] : memref<2x128x128xbf16, #tpu.memory_space<vmem>>, vector<1x128x128xbf16>
    %22 = vector.shape_cast %21 : vector<1x128x128xbf16> to vector<128x128xbf16>
    %cst_17 = arith.constant dense<0.000000e+00> : vector<8x128xf32>
    %23 = tpu.matmul %20, %22, %cst_17 {dimension_numbers = #tpu.dot_dimension_numbers<[1], [0], [0], [1], [0, 0, 1, 1], [], []>} : vector<8x128xbf16>, vector<128x128xbf16>, vector<8x128xf32> -> vector<8x128xf32>
    %c2 = arith.constant 2 : index
    %c0_18 = arith.constant 0 : index
    %c0_19 = arith.constant 0 : index
    %24 = vector.load %arg4[%c2, %c0_18, %c0_19] : memref<3x1x128xf32, #tpu.memory_space<vmem>>, vector<1x1x128xf32>
    %25 = vector.shape_cast %24 : vector<1x1x128xf32> to vector<1x128xf32>
    %26 = vector.broadcast %25 : vector<1x128xf32> to vector<8x128xf32>
    %27 = arith.addf %23, %26 : vector<8x128xf32>
    %cst_20 = arith.constant 0.000000e+00 : f32
    %28 = vector.broadcast %cst_20 : f32 to vector<8x128xf32>
    %29 = arith.maximumf %27, %28 : vector<8x128xf32>
    %30 = arith.truncf %29 : vector<8x128xf32> to vector<8x128xbf16>
    %c0_21 = arith.constant 0 : index
    %c0_22 = arith.constant 0 : index
    %31 = vector.load %arg5[%c0_21, %c0_22] : memref<8x128xbf16, #tpu.memory_space<vmem>>, vector<8x128xbf16>
    tpu.vector_store %arg5[%c0_21, %c0_22], %30 {strides = array<i32>} : memref<8x128xbf16, #tpu.memory_space<vmem>>, vector<8x128xbf16>,
    return
  }
  func.func @transform_0(%arg0: i32) -> (i32, i32) {
    %c0_i32 = arith.constant 0 : i32
    %c0_i32_0 = arith.constant 0 : i32
    return %arg0, %c0_i32 : i32, i32
  }
  func.func @transform_1(%arg0: i32) -> (i32, i32) {
    %c0_i32 = arith.constant 0 : i32
    %c0_i32_0 = arith.constant 0 : i32
    %c0_i32_1 = arith.constant 0 : i32
    return %c0_i32, %c0_i32_0 : i32, i32
  }
  func.func @transform_2(%arg0: i32) -> (i32, i32, i32) {
    %c0_i32 = arith.constant 0 : i32
    %c0_i32_0 = arith.constant 0 : i32
    %c0_i32_1 = arith.constant 0 : i32
    %c0_i32_2 = arith.constant 0 : i32
    return %c0_i32, %c0_i32_0, %c0_i32_1 : i32, i32, i32
  }
  func.func @transform_3(%arg0: i32) -> (i32, i32, i32) {
    %c0_i32 = arith.constant 0 : i32
    %c0_i32_0 = arith.constant 0 : i32
    %c0_i32_1 = arith.constant 0 : i32
    %c0_i32_2 = arith.constant 0 : i32
    return %c0_i32, %c0_i32_0, %c0_i32_1 : i32, i32, i32
  }
  func.func @transform_4(%arg0: i32) -> (i32, i32) {
    %c0_i32 = arith.constant 0 : i32
    %c0_i32_0 = arith.constant 0 : i32
    return %arg0, %c0_i32 : i32, i32
  }
}

</mosaic_0001>

<llo_original>
// kernel: tpu_custom_call.1
$region0: #{tpu_custom_call.1}
  #allocation0 [shape = 'u32[]', space=smem, size = 0x4, offset = 0x4, fixed_abs, tag = 'smem constant byte address 0x4 - core index']
  #allocation1 [shape = 'u32[144,128]{1,0:T(1,128)}', space=vmem, size = 0x12000, scoped, tag = 'internal scratch']
  %s0 = inlined_call_operand.hbm [shape: f32[8,32], index: 0, kind: input, shape index: {}]
  %s1 = inlined_call_operand.hbm [shape: bf16[32,128], index: 1, kind: input, shape index: {}]
  %s2 = inlined_call_operand.hbm [shape: bf16[2,128,128], index: 2, kind: input, shape index: {}]
  %s3 = inlined_call_operand.vmem [shape: f32[3,1,128], index: 3, kind: input, shape index: {}]
  %s4 = inlined_call_operand.hbm [shape: bf16[8,128], index: 4, kind: output, shape index: {}]
  %s5 = sld [smem:[#allocation0]]
  $region38: #{tpu_custom_call.1} parent=0
    _
  %s7 = ssub.s32 1, %s5
  %s8 = scalar_select 0, %s7, %s5
  $region1: #{tpu_custom_call.1} parent=0
    #allocation2 [shape = 'u8[4096]{0}', space=vmem, size = 0x1000, scoped, tag = 'input window, operand 0, single buffered']
    #allocation3 [shape = 's32[1]{0}', space=sflag, size = 0x4, scoped, tag = 'scoped memory for tpu_custom_call.1']
    #allocation4 [shape = 's32[1]{0}', space=sflag, size = 0x4, scoped, tag = 'scoped memory for tpu_custom_call.1']
    #allocation5 [shape = 'u8[8192]{0}', space=vmem, size = 0x2000, scoped, tag = 'input window, operand 1, single buffered']
    #allocation6 [shape = 's32[1]{0}', space=sflag, size = 0x4, scoped, tag = 'scoped memory for tpu_custom_call.1']
    #allocation7 [shape = 'u8[65536]{0}', space=vmem, size = 0x10000, scoped, tag = 'input window, operand 2, single buffered']
    #allocation8 [shape = 'u8[2048]{0}', space=vmem, size = 0x800, scoped, tag = 'output window, operand 0, single buffered']
    %9 = vsyncpa [#allocation3], 0
    %10 = vsyncpa [#allocation6], 0
    %11 = vsyncpa [#allocation4], 0
    // Predicated region
    $region2: #{tpu_custom_call.1} parent=1 // pred_check
      _
    $region3: #{tpu_custom_call.1} parent=1 // pred_check_branch
      %13 = sbr.rel (0) target = $region5
    $region4: #{tpu_custom_call.1} parent=1 // pred_region
      %s15 = ssub.s32 128, 128
      %16 = vsyncadd [#allocation3], %s15
      %s18 = sshll.u32 [#allocation2], 4
      %s19 = int_to_ptr.vmem [resolvable:$true] %s18
      %21 = dma.hbm_to_vmem [thread:$0]  %s0, 128, %s19, [#allocation3]
    $region5: #{tpu_custom_call.1} parent=1 // pred_fallthru
      _
    // Predicated region
    $region6: #{tpu_custom_call.1} parent=1 // pred_check
      _
    $region7: #{tpu_custom_call.1} parent=1 // pred_check_branch
      %23 = sbr.rel (0) target = $region9
    $region8: #{tpu_custom_call.1} parent=1 // pred_region
      %s25 = ssub.s32 256, 256
      %26 = vsyncadd [#allocation6], %s25
      %s27 = sshll.u32 [#allocation5], 4
      %s28 = int_to_ptr.vmem [resolvable:$true] %s27
      %33 = dma.hbm_to_vmem [thread:$0]  %s1, 256, %s28, [#allocation6], 64, 64, 4
    $region9: #{tpu_custom_call.1} parent=1 // pred_fallthru
      _
    // Predicated region
    $region10: #{tpu_custom_call.1} parent=1 // pred_check
      _
    $region11: #{tpu_custom_call.1} parent=1 // pred_check_branch
      %35 = sbr.rel (0) target = $region13
    $region12: #{tpu_custom_call.1} parent=1 // pred_region
      %s37 = ssub.s32 2048, 2048
      %38 = vsyncadd [#allocation6], %s37
      %s39 = sshll.u32 [#allocation7], 4
      %s40 = int_to_ptr.vmem [resolvable:$true] %s39
      %45 = dma.hbm_to_vmem [thread:$0]  %s2, 2048, %s40, [#allocation6], 64, 64, 4
    $region13: #{tpu_custom_call.1} parent=1 // pred_fallthru
      _
    // Predicated region
    $region14: #{tpu_custom_call.1} parent=1 // pred_check
      _
    $region15: #{tpu_custom_call.1} parent=1 // pred_check_branch
      %47 = sbr.rel (0) target = $region17
    $region16: #{tpu_custom_call.1} parent=1 // pred_region
      _
    $region17: #{tpu_custom_call.1} parent=1 // pred_fallthru
      _
    // Predicated region
    $region18: #{tpu_custom_call.1} parent=1 // pred_check
      _
    $region19: #{tpu_custom_call.1} parent=1 // pred_check_branch
      %49 = sbr.rel (0) target = $region21
    $region20: #{tpu_custom_call.1} parent=1 // pred_region
      %50 = dma.done [#allocation3], 128
    $region21: #{tpu_custom_call.1} parent=1 // pred_fallthru
      _
    // Predicated region
    $region22: #{tpu_custom_call.1} parent=1 // pred_check
      _
    $region23: #{tpu_custom_call.1} parent=1 // pred_check_branch
      %52 = sbr.rel (0) target = $region25
    $region24: #{tpu_custom_call.1} parent=1 // pred_region
      %53 = dma.done [#allocation6], 256
    $region25: #{tpu_custom_call.1} parent=1 // pred_fallthru
      _
    // Predicated region
    $region26: #{tpu_custom_call.1} parent=1 // pred_check
      _
    $region27: #{tpu_custom_call.1} parent=1 // pred_check_branch
      %55 = sbr.rel (0) target = $region29
    $region28: #{tpu_custom_call.1} parent=1 // pred_region
      %56 = dma.done [#allocation6], 2048
    $region29: #{tpu_custom_call.1} parent=1 // pred_fallthru
      _
    %v58 = vld [vmem:[#allocation2] sm:$0xff]
    %v59 = vpack.c.bf16 %v58, %v58
    %v60 = vld [vmem:[#allocation5] sm:$0xf]
    %v61 = vld [vmem:[#allocation5 + $0x4] sm:$0xf]
    %v62 = vld [vmem:[#allocation5 + $0x8] sm:$0xf]
    %v63 = vld [vmem:[#allocation5 + $0xc] sm:$0xf]
    %v64 = vld [vmem:[%s3] sm:$0x1]
    %v66 = vlaneseq
    %v67 = vshrl.u32 %v66, 7
    %v68 = vsub.s32 0, %v67
    %v69 = vrot.slane %v64, %v68
    %v75 = vunpack.c.l.b16 %v60
    %v76 = vunpack.c.l.b16 %v61
    %v77 = vunpack.c.l.b16 %v62
    %v78 = vunpack.c.l.b16 %v63
    %v79 = vpack.c.b16 %v76, %v75
    %v80 = vpack.c.b16 %v78, %v77
    %vm83 = vcmask 261120
    %v85 = vsel %vm83, %v59, 0
    %87 = vmatprep.subr.bf16.mxu0 0
    %88 = vmatpush1.bf16.msra.mxu0 %v79
    %89 = vmatprep.subr.bf16.mxu0 0
    %90 = vmatpush1.bf16.msra.mxu0 %v80
    %91 = vmatprep.subr.bf16.mxu0 0
    %92 = vmatpush1.bf16.msra.mxu0 0
    %93 = vmatprep.subr.bf16.mxu0 0
    %94 = vmatpush1.bf16.msra.mxu0 0
    %95 = vmatprep.subr.bf16.mxu0 0
    %96 = vmatpush1.bf16.msra.mxu0 0
    %97 = vmatprep.subr.bf16.mxu0 0
    %98 = vmatpush1.bf16.msra.mxu0 0
    %99 = vmatprep.subr.bf16.mxu0 0
    %100 = vmatpush1.bf16.msra.mxu0 0
    %101 = vmatprep.subr.bf16.mxu0 0
    %102 = vmatpush1.bf16.msra.mxu0 0
    %103 = vmatprep.subr.bf16.mxu0 0
    %104 = vmatpush1.bf16.msra.mxu0 0
    %105 = vmatprep.subr.bf16.mxu0 0
    %106 = vmatpush1.bf16.msra.mxu0 0
    %107 = vmatprep.subr.bf16.mxu0 0
    %108 = vmatpush1.bf16.msra.mxu0 0
    %109 = vmatprep.subr.bf16.mxu0 0
    %110 = vmatpush1.bf16.msra.mxu0 0
    %111 = vmatprep.subr.bf16.mxu0 0
    %112 = vmatpush1.bf16.msra.mxu0 0
    %113 = vmatprep.subr.bf16.mxu0 0
    %114 = vmatpush1.bf16.msra.mxu0 0
    %115 = vmatprep.subr.bf16.mxu0 0
    %116 = vmatpush1.bf16.msra.mxu0 0
    %117 = vmatprep.subr.bf16.mxu0 0
    %118 = vmatpush1.bf16.msra.mxu0 0
    %119 = vmatprep.mubr.bf16.mxu0 0
    %120 = vmatmul.mubr.bf16.gmra.mrb[0].mxu0 %v85
    %v121 = vpop.f32.mrb[0].mxu0
    %v122 = vadd.f32 %v69, %v121
    %v123 = vpop.f32.mrb[0].mxu0
    %v124 = vpop.f32.mrb[0].mxu0
    %v125 = vpop.f32.mrb[0].mxu0
    %126 = vdwg.mxu0
    %v127 = vmax.f32 %v122, 0.0
    %v128 = vpack.c.bf16 %v127, %v127
    %v129 = vld [vmem:[#allocation7] sm:$0xf]
    %v130 = vld [vmem:[#allocation7 + $0x4] sm:$0xf]
    %v131 = vld [vmem:[#allocation7 + $0x8] sm:$0xf]
    %v132 = vld [vmem:[#allocation7 + $0xc] sm:$0xf]
    %v133 = vld [vmem:[#allocation7 + $0x10] sm:$0xf]
    %v134 = vld [vmem:[#allocation7 + $0x14] sm:$0xf]
    %v135 = vld [vmem:[#allocation7 + $0x18] sm:$0xf]
    %v136 = vld [vmem:[#allocation7 + $0x1c] sm:$0xf]
    %v137 = vld [vmem:[#allocation7 + $0x20] sm:$0xf]
    %v138 = vld [vmem:[#allocation7 + $0x24] sm:$0xf]
    %v139 = vld [vmem:[#allocation7 + $0x28] sm:$0xf]
    %v140 = vld [vmem:[#allocation7 + $0x2c] sm:$0xf]
    %v141 = vld [vmem:[#allocation7 + $0x30] sm:$0xf]
    %v142 = vld [vmem:[#allocation7 + $0x34] sm:$0xf]
    %v143 = vld [vmem:[#allocation7 + $0x38] sm:$0xf]
    %v144 = vld [vmem:[#allocation7 + $0x3c] sm:$0xf]
    %s145 = scalar_lea.vmem %s3, 1
    %v146 = vld [vmem:[%s145] sm:$0x1]
    %v148 = vlaneseq
    %v149 = vshrl.u32 %v148, 7
    %v150 = vsub.s32 0, %v149
    %v151 = vrot.slane %v146, %v150
    %v169 = vunpack.c.l.b16 %v129
    %v170 = vunpack.c.l.b16 %v130
    %v171 = vunpack.c.l.b16 %v131
    %v172 = vunpack.c.l.b16 %v132
    %v173 = vunpack.c.l.b16 %v133
    %v174 = vunpack.c.l.b16 %v134
    %v175 = vunpack.c.l.b16 %v135
    %v176 = vunpack.c.l.b16 %v136
    %v177 = vunpack.c.l.b16 %v137
    %v178 = vunpack.c.l.b16 %v138
    %v179 = vunpack.c.l.b16 %v139
    %v180 = vunpack.c.l.b16 %v140
    %v181 = vunpack.c.l.b16 %v141
    %v182 = vunpack.c.l.b16 %v142
    %v183 = vunpack.c.l.b16 %v143
    %v184 = vunpack.c.l.b16 %v144
    %v185 = vpack.c.b16 %v170, %v169
    %v186 = vpack.c.b16 %v172, %v171
    %v187 = vpack.c.b16 %v174, %v173
    %v188 = vpack.c.b16 %v176, %v175
    %v189 = vpack.c.b16 %v178, %v177
    %v190 = vpack.c.b16 %v180, %v179
    %v191 = vpack.c.b16 %v182, %v181
    %v192 = vpack.c.b16 %v184, %v183
    %201 = vmatprep.subr.bf16.mxu0 0
    %202 = vmatpush1.bf16.msra.mxu0 %v185
    %203 = vmatprep.subr.bf16.mxu0 0
    %204 = vmatpush1.bf16.msra.mxu0 %v186
    %205 = vmatprep.subr.bf16.mxu0 0
    %206 = vmatpush1.bf16.msra.mxu0 %v187
    %207 = vmatprep.subr.bf16.mxu0 0
    %208 = vmatpush1.bf16.msra.mxu0 %v188
    %209 = vmatprep.subr.bf16.mxu0 0
    %210 = vmatpush1.bf16.msra.mxu0 %v189
    %211 = vmatprep.subr.bf16.mxu0 0
    %212 = vmatpush1.bf16.msra.mxu0 %v190
    %213 = vmatprep.subr.bf16.mxu0 0
    %214 = vmatpush1.bf16.msra.mxu0 %v191
    %215 = vmatprep.subr.bf16.mxu0 0
    %216 = vmatpush1.bf16.msra.mxu0 %v192
    %217 = vmatprep.subr.bf16.mxu0 0
    %218 = vmatpush1.bf16.msra.mxu0 0
    %219 = vmatprep.subr.bf16.mxu0 0
    %220 = vmatpush1.bf16.msra.mxu0 0
    %221 = vmatprep.subr.bf16.mxu0 0
    %222 = vmatpush1.bf16.msra.mxu0 0
    %223 = vmatprep.subr.bf16.mxu0 0
    %224 = vmatpush1.bf16.msra.mxu0 0
    %225 = vmatprep.subr.bf16.mxu0 0
    %226 = vmatpush1.bf16.msra.mxu0 0
    %227 = vmatprep.subr.bf16.mxu0 0
    %228 = vmatpush1.bf16.msra.mxu0 0
    %229 = vmatprep.subr.bf16.mxu0 0
    %230 = vmatpush1.bf16.msra.mxu0 0
    %231 = vmatprep.subr.bf16.mxu0 0
    %232 = vmatpush1.bf16.msra.mxu0 0
    %233 = vmatprep.mubr.bf16.mxu0 0
    %234 = vmatmul.mubr.bf16.gmra.mrb[0].mxu0 %v128
    %v235 = vpop.f32.mrb[0].mxu0
    %v236 = vadd.f32 %v151, %v235
    %v237 = vpop.f32.mrb[0].mxu0
    %v238 = vpop.f32.mrb[0].mxu0
    %v239 = vpop.f32.mrb[0].mxu0
    %240 = vdwg.mxu0
    %v241 = vmax.f32 %v236, 0.0
    %v242 = vpack.c.bf16 %v241, %v241
    %s243 = scalar_lea.vmem [#allocation7], 64
    %v244 = vld [vmem:[%s243] sm:$0xf]
    %v245 = vld [vmem:[%s243 + $0x4] sm:$0xf]
    %v246 = vld [vmem:[%s243 + $0x8] sm:$0xf]
    %v247 = vld [vmem:[%s243 + $0xc] sm:$0xf]
    %v248 = vld [vmem:[%s243 + $0x10] sm:$0xf]
    %v249 = vld [vmem:[%s243 + $0x14] sm:$0xf]
    %v250 = vld [vmem:[%s243 + $0x18] sm:$0xf]
    %v251 = vld [vmem:[%s243 + $0x1c] sm:$0xf]
    %v252 = vld [vmem:[%s243 + $0x20] sm:$0xf]
    %v253 = vld [vmem:[%s243 + $0x24] sm:$0xf]
    %v254 = vld [vmem:[%s243 + $0x28] sm:$0xf]
    %v255 = vld [vmem:[%s243 + $0x2c] sm:$0xf]
    %v256 = vld [vmem:[%s243 + $0x30] sm:$0xf]
    %v257 = vld [vmem:[%s243 + $0x34] sm:$0xf]
    %v258 = vld [vmem:[%s243 + $0x38] sm:$0xf]
    %v259 = vld [vmem:[%s243 + $0x3c] sm:$0xf]
    %s260 = scalar_lea.vmem %s3, 2
    %v261 = vld [vmem:[%s260] sm:$0x1]
    %v263 = vlaneseq
    %v264 = vshrl.u32 %v263, 7
    %v265 = vsub.s32 0, %v264
    %v266 = vrot.slane %v261, %v265
    %v284 = vunpack.c.l.b16 %v244
    %v285 = vunpack.c.l.b16 %v245
    %v286 = vunpack.c.l.b16 %v246
    %v287 = vunpack.c.l.b16 %v247
    %v288 = vunpack.c.l.b16 %v248
    %v289 = vunpack.c.l.b16 %v249
    %v290 = vunpack.c.l.b16 %v250
    %v291 = vunpack.c.l.b16 %v251
    %v292 = vunpack.c.l.b16 %v252
    %v293 = vunpack.c.l.b16 %v253
    %v294 = vunpack.c.l.b16 %v254
    %v295 = vunpack.c.l.b16 %v255
    %v296 = vunpack.c.l.b16 %v256
    %v297 = vunpack.c.l.b16 %v257
    %v298 = vunpack.c.l.b16 %v258
    %v299 = vunpack.c.l.b16 %v259
    %v300 = vpack.c.b16 %v285, %v284
    %v301 = vpack.c.b16 %v287, %v286
    %v302 = vpack.c.b16 %v289, %v288
    %v303 = vpack.c.b16 %v291, %v290
    %v304 = vpack.c.b16 %v293, %v292
    %v305 = vpack.c.b16 %v295, %v294
    %v306 = vpack.c.b16 %v297, %v296
    %v307 = vpack.c.b16 %v299, %v298
    %316 = vmatprep.subr.bf16.mxu0 0
    %317 = vmatpush1.bf16.msra.mxu0 %v300
    %318 = vmatprep.subr.bf16.mxu0 0
    %319 = vmatpush1.bf16.msra.mxu0 %v301
    %320 = vmatprep.subr.bf16.mxu0 0
    %321 = vmatpush1.bf16.msra.mxu0 %v302
    %322 = vmatprep.subr.bf16.mxu0 0
    %323 = vmatpush1.bf16.msra.mxu0 %v303
    %324 = vmatprep.subr.bf16.mxu0 0
    %325 = vmatpush1.bf16.msra.mxu0 %v304
    %326 = vmatprep.subr.bf16.mxu0 0
    %327 = vmatpush1.bf16.msra.mxu0 %v305
    %328 = vmatprep.subr.bf16.mxu0 0
    %329 = vmatpush1.bf16.msra.mxu0 %v306
    %330 = vmatprep.subr.bf16.mxu0 0
    %331 = vmatpush1.bf16.msra.mxu0 %v307
    %332 = vmatprep.subr.bf16.mxu0 0
    %333 = vmatpush1.bf16.msra.mxu0 0
    %334 = vmatprep.subr.bf16.mxu0 0
    %335 = vmatpush1.bf16.msra.mxu0 0
    %336 = vmatprep.subr.bf16.mxu0 0
    %337 = vmatpush1.bf16.msra.mxu0 0
    %338 = vmatprep.subr.bf16.mxu0 0
    %339 = vmatpush1.bf16.msra.mxu0 0
    %340 = vmatprep.subr.bf16.mxu0 0
    %341 = vmatpush1.bf16.msra.mxu0 0
    %342 = vmatprep.subr.bf16.mxu0 0
    %343 = vmatpush1.bf16.msra.mxu0 0
    %344 = vmatprep.subr.bf16.mxu0 0
    %345 = vmatpush1.bf16.msra.mxu0 0
    %346 = vmatprep.subr.bf16.mxu0 0
    %347 = vmatpush1.bf16.msra.mxu0 0
    %348 = vmatprep.mubr.bf16.mxu0 0
    %349 = vmatmul.mubr.bf16.gmra.mrb[0].mxu0 %v242
    %v350 = vpop.f32.mrb[0].mxu0
    %v351 = vadd.f32 %v266, %v350
    %v352 = vpop.f32.mrb[0].mxu0
    %v353 = vpop.f32.mrb[0].mxu0
    %v354 = vpop.f32.mrb[0].mxu0
    %355 = vdwg.mxu0
    %v356 = vmax.f32 %v351, 0.0
    %v357 = vpack.c.bf16 %v356, %v356
    %358 = vst [vmem:[#allocation8] sm:$0xf] %v357
    // Predicated region
    $region30: #{tpu_custom_call.1} parent=1 // pred_check
      _
    $region31: #{tpu_custom_call.1} parent=1 // pred_check_branch
      %360 = sbr.rel (0) target = $region33
    $region32: #{tpu_custom_call.1} parent=1 // pred_region
      %s362 = ssub.s32 64, 64
      %363 = vsyncadd [#allocation4], %s362
      %s365 = sshll.u32 [#allocation8], 4
      %s366 = int_to_ptr.vmem [resolvable:$true] %s365
      %368 = dma.vmem_to_hbm [thread:$0]  %s366, 64, %s4, [#allocation4]
    $region33: #{tpu_custom_call.1} parent=1 // pred_fallthru
      _
    // Predicated region
    $region34: #{tpu_custom_call.1} parent=1 // pred_check
      _
    $region35: #{tpu_custom_call.1} parent=1 // pred_check_branch
      %370 = sbr.rel (0) target = $region37
    $region36: #{tpu_custom_call.1} parent=1 // pred_region
      %371 = dma.done [#allocation4], 64
    $region37: #{tpu_custom_call.1} parent=1 // pred_fallthru
      _
    %372 = vsyncpa [#allocation3], 1
    %373 = vsyncpa [#allocation6], 1
    %374 = vsyncpa [#allocation4], 1

</llo_original>
